<compile_context>
chip_gen: v7x
topology: tpu7x:2x2x1
jax: 0.10.0
libtpu: 0.0.40
codegen_flags: <defaults>
</compile_context>

<pallas_src>
import jax
import jax.numpy as jnp
from jax.experimental import pallas as pl
from jax.experimental.pallas import tpu as pltpu


# --------------------------- small host-side utils -------------------------- #

def _round_up(n, m):
    return -(-n // m) * m


def _pick_chunk(total, target=512):
    """Largest chunk <= target that divides `total` (multiple of 128 lanes when
    chunking is actually needed); falls back to no chunking."""
    if total <= target:
        return total
    c = (target // 128) * 128
    while c >= 128:
        if total % c == 0:
            return c
        c -= 128
    return total


def _tpu_vmem_capacity():
    try:
        info = pltpu.get_tpu_info()
        return int(getattr(info, "vmem_capacity_bytes", 64 << 20))
    except Exception:  # pragma: no cover - conservative fallback
        return 64 << 20


def _default_block_t():
    # 128 MiB VMEM generations (v5e/v6e) can afford larger token tiles, which
    # directly reduces per-tile expert-weight re-fetch (the dominant HBM
    # traffic).  64 MiB generations (v7x) stay at 256.
    return 512 if _tpu_vmem_capacity() >= (100 << 20) else 256


def _vmem_limit_bytes(block_bytes, scratch_bytes):
    # Double-buffered blocked operands + scratch, plus headroom for Mosaic
    # internal scratch; capped below the physical VMEM of this generation.
    need = 2 * (2 * block_bytes + scratch_bytes) + (4 << 20)
    cap = max(_tpu_vmem_capacity() - (8 << 20), 32 << 20)
    return int(min(max(need, 32 << 20), cap))


def _fuse_gate_up(w_gate, w_up, chunk):
    """Interleave gate/up weights per chunk: one (.., H, 2*chunk) MXU dot per
    chunk instead of two."""
    *lead, h, inter = w_gate.shape
    n = inter // chunk
    g = w_gate.reshape(*lead, h, n, chunk)
    u = w_up.reshape(*lead, h, n, chunk)
    return jnp.concatenate([g, u], axis=-1).reshape(*lead, h, n * 2 * chunk)


# ----------------------------- Pallas kernels ------------------------------ #

def _shared_expert_kernel(x_ref, sg_ref, wgu_ref, wd_ref, o_ref, acc_ref):
    # grid = (token tiles, SI chunks); accumulate partial down-proj over chunks.
    si = pl.program_id(1)

    @pl.when(si == 0)
    def _init():
        acc_ref[...] = jnp.zeros_like(acc_ref)

    x = x_ref[...]
    gu = jnp.dot(x, wgu_ref[...], preferred_element_type=jnp.float32)
    t = wd_ref.shape[0]
    g = gu[:, :t]
    u = gu[:, t:]
    h = (g * jax.nn.sigmoid(g) * u).astype(x.dtype)      # SiLU math in f32
    acc_ref[...] += jnp.dot(h, wd_ref[...], preferred_element_type=jnp.float32)

    @pl.when(si == pl.num_programs(1) - 1)
    def _store():
        o_ref[...] = (sg_ref[...] * acc_ref[...]).astype(o_ref.dtype)


def _moe_experts_kernel(counts_ref, fetch_e_ref, fetch_c_ref,   # SMEM prefetch
                        shared_ref, x_ref, rw_ref,              # (tm,H) f32 / bf16 / (1,1,tm,1)
                        wgu_ref, wd_ref,                        # (1,H,2tI) / (1,tI,H) bf16
                        o_ref,                                  # (tm,H)
                        acc_ref):                               # VMEM (tm,H) f32
    del fetch_e_ref, fetch_c_ref   # only used by the index_maps (DMA elision)
    i = pl.program_id(0)
    e = pl.program_id(1)
    c = pl.program_id(2)
    n_e = pl.num_programs(1)
    n_c = pl.num_programs(2)

    @pl.when(jnp.logical_and(e == 0, c == 0))
    def _init():
        # Accumulator starts at the (already gated) shared-expert output.
        acc_ref[...] = shared_ref[...]

    # Skip MXU work for experts that got no tokens in this tile; the matching
    # index_maps also elide the weight DMA for those steps.
    @pl.when(counts_ref[i * n_e + e] > 0)
    def _expert_chunk():
        x = x_ref[...]
        gu = jnp.dot(x, wgu_ref[0], preferred_element_type=jnp.float32)
        t = wd_ref.shape[1]
        g = gu[:, :t]
        u = gu[:, t:]
        h = (g * jax.nn.sigmoid(g) * u).astype(x.dtype)
        y = jnp.dot(h, wd_ref[0], preferred_element_type=jnp.float32)
        # rw_ref carries column e of the dense routing-weight matrix (0 for
        # tokens that did not select this expert) -> matches index_add_ exactly.
        acc_ref[...] += y * rw_ref[0, 0]

    @pl.when(jnp.logical_and(e == n_e - 1, c == n_c - 1))
    def _store():
        o_ref[...] = acc_ref[...].astype(o_ref.dtype)


# ------------------------------ Pallas wrappers ---------------------------- #

def shared_expert_pallas(x_bf16, shared_sig, wgu, wd, *, tm, tsi):
    Tp, H = x_bf16.shape
    SI = wd.shape[0]
    nsi = SI // tsi
    nt = Tp // tm

    block_bytes = (tm * H * 2 + tm * 4 + H * 2 * tsi * 2 + tsi * H * 2
                   + tm * H * 4)
    scratch_bytes = tm * H * 4
    cost = pl.CostEstimate(
        flops=int(6 * Tp * H * SI),
        transcendentals=int(Tp * SI),
        bytes_accessed=int(nt * 3 * H * SI * 2 + Tp * (H * 2 + 4 + H * 4)))

    return pl.pallas_call(
        _shared_expert_kernel,
        out_shape=jax.ShapeDtypeStruct((Tp, H), jnp.float32),
        grid=(nt, nsi),
        in_specs=[
            pl.BlockSpec((tm, H), lambda i, s: (i, 0)),          # x
            pl.BlockSpec((tm, 1), lambda i, s: (i, 0)),          # sigmoid(gate)
            pl.BlockSpec((H, 2 * tsi), lambda i, s: (0, s)),     # fused gate|up
            pl.BlockSpec((tsi, H), lambda i, s: (s, 0)),         # down
        ],
        out_specs=pl.BlockSpec((tm, H), lambda i, s: (i, 0)),
        scratch_shapes=[pltpu.VMEM((tm, H), jnp.float32)],
        compiler_params=pltpu.CompilerParams(
            dimension_semantics=("parallel", "arbitrary"),
            vmem_limit_bytes=_vmem_limit_bytes(block_bytes, scratch_bytes)),
        cost_estimate=cost,
    )(x_bf16, shared_sig, wgu, wd)


def moe_experts_pallas(counts_flat, fetch_e, fetch_c, shared_out, x_bf16, rw_r,
                       wgu, wd, *, out_dtype, tm, ti):
    Tp, H = x_bf16.shape
    E, I, _ = wd.shape
    n_ic = I // ti
    nt = Tp // tm
    out_bytes = jnp.dtype(out_dtype).itemsize

    # Empty experts repeat the previous non-empty expert's (expert, chunk)
    # block index -> Pallas elides the weight copy-in for those steps.
    def wgu_map(i, e, c, cnt, fe, fc):
        k = i * E + e
        return (fe[k], 0, fc[k * n_ic + c])

    def wd_map(i, e, c, cnt, fe, fc):
        k = i * E + e
        return (fe[k], fc[k * n_ic + c], 0)

    grid_spec = pltpu.PrefetchScalarGridSpec(
        num_scalar_prefetch=3,
        grid=(nt, E, n_ic),
        in_specs=[
            pl.BlockSpec((tm, H), lambda i, e, c, cnt, fe, fc: (i, 0)),       # shared out
            pl.BlockSpec((tm, H), lambda i, e, c, cnt, fe, fc: (i, 0)),       # x
            pl.BlockSpec((1, 1, tm, 1),
                         lambda i, e, c, cnt, fe, fc: (e, i, 0, 0)),          # rw column e
            pl.BlockSpec((1, H, 2 * ti), wgu_map),                            # fused gate|up
            pl.BlockSpec((1, ti, H), wd_map),                                 # down
        ],
        out_specs=pl.BlockSpec((tm, H), lambda i, e, c, cnt, fe, fc: (i, 0)),
        scratch_shapes=[pltpu.VMEM((tm, H), jnp.float32)],
    )

    block_bytes = (tm * H * 4 + tm * H * 2 + tm * 4
                   + H * 2 * ti * 2 + ti * H * 2 + tm * H * out_bytes)
    scratch_bytes = tm * H * 4
    cost = pl.CostEstimate(
        flops=int(6 * Tp * E * H * I),                  # dense upper bound
        transcendentals=int(Tp * E * I),
        bytes_accessed=int(nt * E * 3 * H * I * 2
                           + Tp * H * (2 + 4 + out_bytes) + Tp * E * 4))

    return pl.pallas_call(
        _moe_experts_kernel,
        out_shape=jax.ShapeDtypeStruct((Tp, H), out_dtype),
        grid_spec=grid_spec,
        compiler_params=pltpu.CompilerParams(
            dimension_semantics=("parallel", "arbitrary", "arbitrary"),
            vmem_limit_bytes=_vmem_limit_bytes(block_bytes, scratch_bytes)),
        cost_estimate=cost,
    )(counts_flat, fetch_e, fetch_c, shared_out, x_bf16, rw_r, wgu, wd)


# ------------------------------ Forward (glue) ------------------------------ #

def qwen2_moe_forward(hidden_states, params, *, top_k, norm_topk_prob,
                      block_t=None):
    B, S, H = hidden_states.shape
    E = params["gate"].shape[1]
    I = params["w_gate_proj"].shape[2]
    SI = params["ws_gate_proj"].shape[1]

    x = hidden_states.reshape(-1, H)                              # (T, H)
    T = x.shape[0]

    # Router + top-k in XLA (tiny; keeps logits/top-k identical to reference).
    router_logits = (x @ params["gate"]).astype(jnp.float32)      # (T, E)
    routing = jax.nn.softmax(router_logits, axis=-1)
    topk_w, topk_idx = jax.lax.top_k(routing, top_k)
    if norm_topk_prob:
        topk_w = topk_w / jnp.sum(topk_w, axis=-1, keepdims=True)
    topk_w = topk_w.astype(hidden_states.dtype).astype(jnp.float32)
    shared_sig = jax.nn.sigmoid(
        (x @ params["shared_gate"]).astype(jnp.float32))          # (T, 1)

    # Token tile (per-generation) and padding.
    if block_t is None:
        block_t = _default_block_t()
    tm = block_t if T >= block_t else max(16, _round_up(T, 16))   # bf16 min 16
    Tp = _round_up(T, tm)
    nt = Tp // tm
    pad = Tp - T

    rows = jnp.arange(T)[:, None]
    dense_rw = jnp.zeros((T, E), jnp.float32).at[rows, topk_idx].set(topk_w)
    sel = jnp.zeros((T, E), jnp.int32).at[rows, topk_idx].set(1)

    x_p = jnp.pad(x, ((0, pad), (0, 0))) if pad else x
    dense_rw = jnp.pad(dense_rw, ((0, pad), (0, 0))) if pad else dense_rw
    sel = jnp.pad(sel, ((0, pad), (0, 0))) if pad else sel
    shared_sig = jnp.pad(shared_sig, ((0, pad), (0, 0))) if pad else shared_sig

    # Per-(tile, expert) counts -> compute skip + weight-DMA elision indices.
    ti = _pick_chunk(I)
    n_ic = I // ti
    tsi = _pick_chunk(SI)
    counts = sel.reshape(nt, tm, E).sum(axis=1).astype(jnp.int32)       # (nt,E)
    nonempty = counts > 0
    last = jnp.where(nonempty, jnp.arange(E, dtype=jnp.int32)[None, :], -1)
    fetch_e = jnp.maximum(jax.lax.cummax(last, axis=1), 0).astype(jnp.int32)
    fetch_c = jnp.where(nonempty[:, :, None],
                        jnp.arange(n_ic, dtype=jnp.int32)[None, None, :],
                        n_ic - 1).astype(jnp.int32)

    counts_flat = counts.reshape(-1)
    fetch_e_flat = fetch_e.reshape(-1)
    fetch_c_flat = fetch_c.reshape(-1)

    # Routing weights delivered per expert by the pipeline: (E, nt, tm, 1).
    rw_r = dense_rw.reshape(nt, tm, E).transpose(2, 0, 1)[..., None]

    bf16 = jnp.bfloat16
    x_bf16 = x_p.astype(bf16)
    # NOTE: weight packing (gate|up fusion, bf16 cast) would be done once at
    # load time in a real deployment; it is redone per call here for clarity.
    wgu = _fuse_gate_up(params["w_gate_proj"], params["w_up_proj"], ti).astype(bf16)
    wd = params["w_down_proj"].astype(bf16)
    wsgu = _fuse_gate_up(params["ws_gate_proj"], params["ws_up_proj"], tsi).astype(bf16)
    wsd = params["ws_down_proj"].astype(bf16)

    shared_out = shared_expert_pallas(x_bf16, shared_sig, wsgu, wsd,
                                      tm=tm, tsi=tsi)              # (Tp, H) f32

    out_p = moe_experts_pallas(counts_flat, fetch_e_flat, fetch_c_flat,
                               shared_out, x_bf16, rw_r, wgu, wd,
                               out_dtype=hidden_states.dtype, tm=tm, ti=ti)

    final = out_p[:T].reshape(B, S, H)
    return final, router_logits


# ------------------------------ Reference (JAX) ----------------------------- #

def reference_forward(hidden_states, params, *, top_k, norm_topk_prob):
    B, S, H = hidden_states.shape
    x = hidden_states.reshape(-1, H)
    logits = (x @ params["gate"]).astype(jnp.float32)
    rw = jax.nn.softmax(logits, axis=1)
    w, idx = jax.lax.top_k(rw, top_k)
    if norm_topk_prob:
        w = w / jnp.sum(w, axis=-1, keepdims=True)
    w = w.astype(x.dtype)
    T, E = logits.shape
    dense = jnp.zeros((T, E), x.dtype).at[jnp.arange(T)[:, None], idx].set(w)

    def silu(v):
        return v * jax.nn.sigmoid(v)

    out = jnp.zeros((T, H), x.dtype)
    for e in range(E):
        g = x @ params["w_gate_proj"][e]
        u = x @ params["w_up_proj"][e]
        y = (silu(g) * u) @ params["w_down_proj"][e]
        out = out + y * dense[:, e:e + 1]
    shared = (silu(x @ params["ws_gate_proj"]) * (x @ params["ws_up_proj"])) \
        @ params["ws_down_proj"]
    shared = jax.nn.sigmoid(x @ params["shared_gate"]) * shared
    out = out + shared
    return out.reshape(B, S, H), logits


# ----------------------------------- Main ----------------------------------- #

if __name__ == "__main__":
    B, S, H = 2, 8, 64                 # batch, seq, hidden
    E, TOP_K = 4, 2                    # num_experts, top_k
    MOE_I, SHARED_I = 32, 64           # moe / shared-expert intermediate sizes
    NORM_TOPK_PROB = True

    key = jax.random.PRNGKey(0)
    ks = jax.random.split(key, 9)
    sc = 0.05
    params = {
        "gate":         jax.random.normal(ks[0], (H, E), jnp.float32) * sc,
        "w_gate_proj":  jax.random.normal(ks[1], (E, H, MOE_I), jnp.float32) * sc,
        "w_up_proj":    jax.random.normal(ks[2], (E, H, MOE_I), jnp.float32) * sc,
        "w_down_proj":  jax.random.normal(ks[3], (E, MOE_I, H), jnp.float32) * sc,
        "ws_gate_proj": jax.random.normal(ks[4], (H, SHARED_I), jnp.float32) * sc,
        "ws_up_proj":   jax.random.normal(ks[5], (H, SHARED_I), jnp.float32) * sc,
        "ws_down_proj": jax.random.normal(ks[6], (SHARED_I, H), jnp.float32) * sc,
        "shared_gate":  jax.random.normal(ks[7], (H, 1), jnp.float32) * sc,
    }
    hidden_states = jax.random.normal(ks[8], (B, S, H), jnp.float32)

    out, logits = qwen2_moe_forward(
        hidden_states, params, top_k=TOP_K, norm_topk_prob=NORM_TOPK_PROB)
    jax.block_until_ready((out, logits))

    ref_out, ref_logits = reference_forward(
        hidden_states, params, top_k=TOP_K, norm_topk_prob=NORM_TOPK_PROB)
    assert out.shape == (B, S, H) and logits.shape == (B * S, E)
    assert jnp.allclose(logits, ref_logits, rtol=2e-2, atol=2e-2)
    assert jnp.allclose(out, ref_out, rtol=2e-2, atol=2e-2)

    print("KERNEL_OK")
</pallas_src>

<mosaic_0001>
module attributes {stable_mosaic.version = 11 : i64} {
  func.func @_shared_expert_kernel(%arg0: i32, %arg1: i32, %arg2: memref<16x64xbf16, #tpu.memory_space<vmem>>, %arg3: memref<16x1xf32, #tpu.memory_space<vmem>>, %arg4: memref<64x128xbf16, #tpu.memory_space<vmem>>, %arg5: memref<64x64xbf16, #tpu.memory_space<vmem>>, %arg6: memref<16x64xf32, #tpu.memory_space<vmem>>, %arg7: memref<16x64xf32, #tpu.memory_space<vmem>>) attributes {dimension_semantics = [#tpu.dimension_semantics<parallel>, #tpu.dimension_semantics<arbitrary>], iteration_bounds = array<i64: 1, 1>, scalar_prefetch = 0 : i64, scratch_operands = 1 : i64, tpu.core_type = #tpu.core_type<tc>, window_params = [{transform_indices = @transform_0, window_bounds = array<i64: 16, 64>}, {transform_indices = @transform_1, window_bounds = array<i64: 16, 1>}, {transform_indices = @transform_2, window_bounds = array<i64: 64, 128>}, {transform_indices = @transform_3, window_bounds = array<i64: 64, 64>}, {transform_indices = @transform_4, window_bounds = array<i64: 16, 64>}]} {
    %c0_i32 = arith.constant 0 : i32
    %0 = arith.cmpi eq, %arg1, %c0_i32 : i32
    %1 = arith.extui %0 : i1 to i32
    %c0_i32_0 = arith.constant 0 : i32
    %2 = arith.cmpi ne, %1, %c0_i32_0 : i32
    scf.if %2 {
      %cst_14 = arith.constant 0.000000e+00 : f32
      %24 = vector.broadcast %cst_14 : f32 to vector<16x64xf32>
      %c0_15 = arith.constant 0 : index
      %c0_16 = arith.constant 0 : index
      %25 = vector.load %arg7[%c0_15, %c0_16] : memref<16x64xf32, #tpu.memory_space<vmem>>, vector<16x64xf32>
      tpu.vector_store %arg7[%c0_15, %c0_16], %24 {strides = array<i32>} : memref<16x64xf32, #tpu.memory_space<vmem>>, vector<16x64xf32>,
    } else {
    }
    %c0 = arith.constant 0 : index
    %c0_1 = arith.constant 0 : index
    %3 = vector.load %arg2[%c0, %c0_1] : memref<16x64xbf16, #tpu.memory_space<vmem>>, vector<16x64xbf16>
    %c0_2 = arith.constant 0 : index
    %c0_3 = arith.constant 0 : index
    %4 = vector.load %arg4[%c0_2, %c0_3] : memref<64x128xbf16, #tpu.memory_space<vmem>>, vector<64x128xbf16>
    %cst = arith.constant dense<0.000000e+00> : vector<16x128xf32>
    %5 = tpu.matmul %3, %4, %cst {dimension_numbers = #tpu.dot_dimension_numbers<[1], [0], [0], [1], [0, 0, 1, 1], [], []>} : vector<16x64xbf16>, vector<64x128xbf16>, vector<16x128xf32> -> vector<16x128xf32>
    %6 = vector.extract_strided_slice %5 {offsets = [0, 0], sizes = [16, 64], strides = [1, 1]} : vector<16x128xf32> to vector<16x64xf32>
    %7 = vector.extract_strided_slice %5 {offsets = [0, 64], sizes = [16, 64], strides = [1, 1]} : vector<16x128xf32> to vector<16x64xf32>
    %8 = arith.negf %6 : vector<16x64xf32>
    %9 = math.exp %8 : vector<16x64xf32>
    %cst_4 = arith.constant 1.000000e+00 : f32
    %10 = vector.broadcast %cst_4 : f32 to vector<16x64xf32>
    %11 = arith.addf %10, %9 : vector<16x64xf32>
    %12 = arith.divf %10, %11 : vector<16x64xf32>
    %13 = arith.mulf %6, %12 : vector<16x64xf32>
    %14 = arith.mulf %13, %7 : vector<16x64xf32>
    %15 = arith.truncf %14 : vector<16x64xf32> to vector<16x64xbf16>
    %c0_5 = arith.constant 0 : index
    %c0_6 = arith.constant 0 : index
    %16 = vector.load %arg7[%c0_5, %c0_6] : memref<16x64xf32, #tpu.memory_space<vmem>>, vector<16x64xf32>
    %c0_7 = arith.constant 0 : index
    %c0_8 = arith.constant 0 : index
    %17 = vector.load %arg5[%c0_7, %c0_8] : memref<64x64xbf16, #tpu.memory_space<vmem>>, vector<64x64xbf16>
    %cst_9 = arith.constant dense<0.000000e+00> : vector<16x64xf32>
    %18 = tpu.matmul %15, %17, %cst_9 {dimension_numbers = #tpu.dot_dimension_numbers<[1], [0], [0], [1], [0, 0, 1, 1], [], []>} : vector<16x64xbf16>, vector<64x64xbf16>, vector<16x64xf32> -> vector<16x64xf32>
    %19 = arith.addf %16, %18 : vector<16x64xf32>
    %c0_10 = arith.constant 0 : index
    %c0_11 = arith.constant 0 : index
    %20 = vector.load %arg7[%c0_10, %c0_11] : memref<16x64xf32, #tpu.memory_space<vmem>>, vector<16x64xf32>
    tpu.vector_store %arg7[%c0_10, %c0_11], %19 {strides = array<i32>} : memref<16x64xf32, #tpu.memory_space<vmem>>, vector<16x64xf32>,
    %c0_i32_12 = arith.constant 0 : i32
    %21 = arith.cmpi eq, %arg1, %c0_i32_12 : i32
    %22 = arith.extui %21 : i1 to i32
    %c0_i32_13 = arith.constant 0 : i32
    %23 = arith.cmpi ne, %22, %c0_i32_13 : i32
    scf.if %23 {
      %c0_14 = arith.constant 0 : index
      %c0_15 = arith.constant 0 : index
      %24 = vector.load %arg3[%c0_14, %c0_15] : memref<16x1xf32, #tpu.memory_space<vmem>>, vector<16x1xf32>
      %c0_16 = arith.constant 0 : index
      %c0_17 = arith.constant 0 : index
      %25 = vector.load %arg7[%c0_16, %c0_17] : memref<16x64xf32, #tpu.memory_space<vmem>>, vector<16x64xf32>
      %26 = vector.broadcast %24 : vector<16x1xf32> to vector<16x64xf32>
      %27 = arith.mulf %26, %25 : vector<16x64xf32>
      %c0_18 = arith.constant 0 : index
      %c0_19 = arith.constant 0 : index
      %28 = vector.load %arg6[%c0_18, %c0_19] : memref<16x64xf32, #tpu.memory_space<vmem>>, vector<16x64xf32>
      tpu.vector_store %arg6[%c0_18, %c0_19], %27 {strides = array<i32>} : memref<16x64xf32, #tpu.memory_space<vmem>>, vector<16x64xf32>,
    } else {
    }
    return
  }
  func.func @transform_0(%arg0: i32, %arg1: i32) -> (i32, i32) {
    %c0_i32 = arith.constant 0 : i32
    %c0_i32_0 = arith.constant 0 : i32
    return %arg0, %c0_i32 : i32, i32
  }
  func.func @transform_1(%arg0: i32, %arg1: i32) -> (i32, i32) {
    %c0_i32 = arith.constant 0 : i32
    %c0_i32_0 = arith.constant 0 : i32
    return %arg0, %c0_i32 : i32, i32
  }
  func.func @transform_2(%arg0: i32, %arg1: i32) -> (i32, i32) {
    %c0_i32 = arith.constant 0 : i32
    %c0_i32_0 = arith.constant 0 : i32
    return %c0_i32, %arg1 : i32, i32
  }
  func.func @transform_3(%arg0: i32, %arg1: i32) -> (i32, i32) {
    %c0_i32 = arith.constant 0 : i32
    %c0_i32_0 = arith.constant 0 : i32
    return %arg1, %c0_i32 : i32, i32
  }
  func.func @transform_4(%arg0: i32, %arg1: i32) -> (i32, i32) {
    %c0_i32 = arith.constant 0 : i32
    %c0_i32_0 = arith.constant 0 : i32
    return %arg0, %c0_i32 : i32, i32
  }
}

</mosaic_0001>

<llo_original>
// kernel: tpu_custom_call.1
$region0: #{tpu_custom_call.1}
  #allocation0 [shape = 'u32[]', space=smem, size = 0x4, offset = 0x4, fixed_abs, tag = 'smem constant byte address 0x4 - core index']
  #allocation1 [shape = 'u32[144,128]{1,0:T(1,128)}', space=vmem, size = 0x12000, scoped, tag = 'internal scratch']
  #allocation2 [shape = 'f32[16,64]{1,0:T(8,128)}', space=vmem, size = 0x2000, scoped, tag = 'scratch operand']
  %s0 = inlined_call_operand.vmem [shape: bf16[16,64], index: 0, kind: input, shape index: {}]
  %s1 = inlined_call_operand.vmem [shape: f32[16,1], index: 1, kind: input, shape index: {}]
  %s2 = inlined_call_operand.hbm [shape: bf16[64,128], index: 2, kind: input, shape index: {}]
  %s3 = inlined_call_operand.hbm [shape: bf16[64,64], index: 3, kind: input, shape index: {}]
  %s4 = inlined_call_operand.hbm [shape: f32[16,64], index: 4, kind: output, shape index: {}]
  %s5 = sld [smem:[#allocation0]]
  $region42: #{tpu_custom_call.1} parent=0
    _
  %s7 = ssub.s32 1, %s5
  %s8 = scalar_select 0, %s7, %s5
  $region1: #{tpu_custom_call.1} parent=0
    #allocation3 [shape = 'u8[16384]{0}', space=vmem, size = 0x4000, scoped, tag = 'input window, operand 2, single buffered']
    #allocation4 [shape = 's32[1]{0}', space=sflag, size = 0x4, scoped, tag = 'scoped memory for tpu_custom_call.1']
    #allocation5 [shape = 's32[1]{0}', space=sflag, size = 0x4, scoped, tag = 'scoped memory for tpu_custom_call.1']
    #allocation6 [shape = 'u8[16384]{0}', space=vmem, size = 0x4000, scoped, tag = 'input window, operand 3, single buffered']
    #allocation7 [shape = 's32[1]{0}', space=sflag, size = 0x4, scoped, tag = 'scoped memory for tpu_custom_call.1']
    #allocation8 [shape = 'u8[8192]{0}', space=vmem, size = 0x2000, scoped, tag = 'output window, operand 0, single buffered']
    %9 = vsyncpa [#allocation4], 0
    %10 = vsyncpa [#allocation7], 0
    %11 = vsyncpa [#allocation5], 0
    // Predicated region
    $region2: #{tpu_custom_call.1} parent=1 // pred_check
      _
    $region3: #{tpu_custom_call.1} parent=1 // pred_check_branch
      %13 = sbr.rel (0) target = $region5
    $region4: #{tpu_custom_call.1} parent=1 // pred_region
      _
    $region5: #{tpu_custom_call.1} parent=1 // pred_fallthru
      _
    // Predicated region
    $region6: #{tpu_custom_call.1} parent=1 // pred_check
      _
    $region7: #{tpu_custom_call.1} parent=1 // pred_check_branch
      %15 = sbr.rel (0) target = $region9
    $region8: #{tpu_custom_call.1} parent=1 // pred_region
      _
    $region9: #{tpu_custom_call.1} parent=1 // pred_fallthru
      _
    // Predicated region
    $region10: #{tpu_custom_call.1} parent=1 // pred_check
      _
    $region11: #{tpu_custom_call.1} parent=1 // pred_check_branch
      %17 = sbr.rel (0) target = $region13
    $region12: #{tpu_custom_call.1} parent=1 // pred_region
      %s19 = ssub.s32 512, 512
      %20 = vsyncadd [#allocation4], %s19
      %s21 = sshll.u32 [#allocation3], 4
      %s22 = int_to_ptr.vmem [resolvable:$true] %s21
      %27 = dma.hbm_to_vmem [thread:$0]  %s2, 512, %s22, [#allocation4], 64, 64, 4
    $region13: #{tpu_custom_call.1} parent=1 // pred_fallthru
      _
    // Predicated region
    $region14: #{tpu_custom_call.1} parent=1 // pred_check
      _
    $region15: #{tpu_custom_call.1} parent=1 // pred_check_branch
      %29 = sbr.rel (0) target = $region17
    $region16: #{tpu_custom_call.1} parent=1 // pred_region
      %s31 = ssub.s32 512, 512
      %32 = vsyncadd [#allocation7], %s31
      %s33 = sshll.u32 [#allocation6], 4
      %s34 = int_to_ptr.vmem [resolvable:$true] %s33
      %39 = dma.hbm_to_vmem [thread:$0]  %s3, 512, %s34, [#allocation7], 64, 64, 4
    $region17: #{tpu_custom_call.1} parent=1 // pred_fallthru
      _
    // Predicated region
    $region18: #{tpu_custom_call.1} parent=1 // pred_check
      _
    $region19: #{tpu_custom_call.1} parent=1 // pred_check_branch
      %41 = sbr.rel (0) target = $region21
    $region20: #{tpu_custom_call.1} parent=1 // pred_region
      %42 = dma.done [#allocation4], 512
    $region21: #{tpu_custom_call.1} parent=1 // pred_fallthru
      _
    // Predicated region
    $region22: #{tpu_custom_call.1} parent=1 // pred_check
      _
    $region23: #{tpu_custom_call.1} parent=1 // pred_check_branch
      %44 = sbr.rel (0) target = $region25
    $region24: #{tpu_custom_call.1} parent=1 // pred_region
      %45 = dma.done [#allocation7], 512
    $region25: #{tpu_custom_call.1} parent=1 // pred_fallthru
      _
    %p47 = scmp.eq.s32.totalorder 0, 0
    // Predicated region
    $region26: #{tpu_custom_call.1} parent=1 // pred_check
      %p48 = pneg %p47
    $region27: #{tpu_custom_call.1} parent=1 // pred_check_branch
      %50 = sbr.rel (%p48) target = $region29
    $region28: #{tpu_custom_call.1} parent=1 // pred_region
      %vm51 = vcmask 523264
      %52 = vst.msk [vmem:[#allocation2] sm:$0xff] %vm51, 0.0
      %53 = vst.msk [vmem:[#allocation2 + $0x8] sm:$0xff] %vm51, 0.0
    $region29: #{tpu_custom_call.1} parent=1 // pred_fallthru
      _
    %v54 = vld [vmem:[%s0] sm:$0xf]
    %v55 = vld [vmem:[%s0 + $0x4] sm:$0xf]
    %v56 = vld [vmem:[#allocation3] sm:$0xf]
    %v57 = vld [vmem:[#allocation3 + $0x4] sm:$0xf]
    %v58 = vld [vmem:[#allocation3 + $0x8] sm:$0xf]
    %v59 = vld [vmem:[#allocation3 + $0xc] sm:$0xf]
    %v60 = vld [vmem:[#allocation3 + $0x10] sm:$0xf]
    %v61 = vld [vmem:[#allocation3 + $0x14] sm:$0xf]
    %v62 = vld [vmem:[#allocation3 + $0x18] sm:$0xf]
    %v63 = vld [vmem:[#allocation3 + $0x1c] sm:$0xf]
    %v66 = vunpack.c.l.b16 %v54
    %v67 = vunpack.c.l.b16 %v55
    %v68 = vpack.c.b16 %v67, %v66
    %v77 = vunpack.c.l.b16 %v56
    %v78 = vunpack.c.l.b16 %v57
    %v79 = vunpack.c.l.b16 %v58
    %v80 = vunpack.c.l.b16 %v59
    %v81 = vunpack.c.l.b16 %v60
    %v82 = vunpack.c.l.b16 %v61
    %v83 = vunpack.c.l.b16 %v62
    %v84 = vunpack.c.l.b16 %v63
    %v85 = vpack.c.b16 %v78, %v77
    %v86 = vpack.c.b16 %v80, %v79
    %v87 = vpack.c.b16 %v82, %v81
    %v88 = vpack.c.b16 %v84, %v83
    %vm93 = vcmask 523264
    %v95 = vsel %vm93, %v68, 0
    %97 = vmatprep.subr.bf16.mxu0 0
    %98 = vmatpush1.bf16.msra.mxu0 %v85
    %99 = vmatprep.subr.bf16.mxu0 0
    %100 = vmatpush1.bf16.msra.mxu0 %v86
    %101 = vmatprep.subr.bf16.mxu0 0
    %102 = vmatpush1.bf16.msra.mxu0 %v87
    %103 = vmatprep.subr.bf16.mxu0 0
    %104 = vmatpush1.bf16.msra.mxu0 %v88
    %105 = vmatprep.subr.bf16.mxu0 0
    %106 = vmatpush1.bf16.msra.mxu0 0
    %107 = vmatprep.subr.bf16.mxu0 0
    %108 = vmatpush1.bf16.msra.mxu0 0
    %109 = vmatprep.subr.bf16.mxu0 0
    %110 = vmatpush1.bf16.msra.mxu0 0
    %111 = vmatprep.subr.bf16.mxu0 0
    %112 = vmatpush1.bf16.msra.mxu0 0
    %113 = vmatprep.subr.bf16.mxu0 0
    %114 = vmatpush1.bf16.msra.mxu0 0
    %115 = vmatprep.subr.bf16.mxu0 0
    %116 = vmatpush1.bf16.msra.mxu0 0
    %117 = vmatprep.subr.bf16.mxu0 0
    %118 = vmatpush1.bf16.msra.mxu0 0
    %119 = vmatprep.subr.bf16.mxu0 0
    %120 = vmatpush1.bf16.msra.mxu0 0
    %121 = vmatprep.subr.bf16.mxu0 0
    %122 = vmatpush1.bf16.msra.mxu0 0
    %123 = vmatprep.subr.bf16.mxu0 0
    %124 = vmatpush1.bf16.msra.mxu0 0
    %125 = vmatprep.subr.bf16.mxu0 0
    %126 = vmatpush1.bf16.msra.mxu0 0
    %127 = vmatprep.subr.bf16.mxu0 0
    %128 = vmatpush1.bf16.msra.mxu0 0
    %129 = vmatprep.mubr.bf16.mxu0 0
    %130 = vmatmul.mubr.bf16.gmra.mrb[0].mxu0 %v95
    %v131 = vpop.f32.mrb[0].mxu0
    %v132 = vadd.f32 0.0, %v131
    %v133 = vpop.f32.mrb[0].mxu0
    %v134 = vpop.f32.mrb[0].mxu0
    %v135 = vadd.f32 0.0, %v134
    %v136 = vpop.f32.mrb[0].mxu0
    %137 = vdwg.mxu0
    %v138 = vxor.u32 %v132, 2147483648
    %v139 = vxor.u32 %v135, 2147483648
    %v140 = vmul.f32 %v138, 1.442695
    %v141 = vpow.pop %v140
    %v142 = vmul.f32 %v139, 1.442695
    %v143 = vpow.pop %v142
    %v144 = vadd.f32 %v141, 1.0
    %v145 = vadd.f32 %v143, 1.0
    %v146 = vrcp.pop %v144
    %v147 = vmul.f32 1.0, %v146
    %v148 = vrcp.pop %v145
    %v149 = vmul.f32 1.0, %v148
    %v150 = vmul.f32 %v132, %v147
    %v151 = vmul.f32 %v135, %v149
    %154 = vrot.lane.b32.xlu0 %v132, 64
    %v155 = vpop.permute.xlu0 %154
    %156 = vrot.lane.b32.xlu0 %v135, 64
    %v157 = vpop.permute.xlu0 %156
    %v160 = vmul.f32 %v150, %v155
    %v161 = vmul.f32 %v151, %v157
    %v162 = vpack.c.bf16 %v161, %v160
    %v163 = vld [vmem:[#allocation2] sm:$0xff]
    %v164 = vld [vmem:[#allocation2 + $0x8] sm:$0xff]
    %v165 = vld [vmem:[#allocation6] sm:$0xf]
    %v166 = vld [vmem:[#allocation6 + $0x4] sm:$0xf]
    %v167 = vld [vmem:[#allocation6 + $0x8] sm:$0xf]
    %v168 = vld [vmem:[#allocation6 + $0xc] sm:$0xf]
    %v169 = vld [vmem:[#allocation6 + $0x10] sm:$0xf]
    %v170 = vld [vmem:[#allocation6 + $0x14] sm:$0xf]
    %v171 = vld [vmem:[#allocation6 + $0x18] sm:$0xf]
    %v172 = vld [vmem:[#allocation6 + $0x1c] sm:$0xf]
    %v181 = vunpack.c.l.b16 %v165
    %v182 = vunpack.c.l.b16 %v166
    %v183 = vunpack.c.l.b16 %v167
    %v184 = vunpack.c.l.b16 %v168
    %v185 = vunpack.c.l.b16 %v169
    %v186 = vunpack.c.l.b16 %v170
    %v187 = vunpack.c.l.b16 %v171
    %v188 = vunpack.c.l.b16 %v172
    %v189 = vpack.c.b16 %v182, %v181
    %v190 = vpack.c.b16 %v184, %v183
    %v191 = vpack.c.b16 %v186, %v185
    %v192 = vpack.c.b16 %v188, %v187
    %v198 = vsel %vm93, %v162, 0
    %200 = vmatprep.subr.bf16.mxu0 0
    %201 = vmatpush1.bf16.msra.mxu0 %v189
    %202 = vmatprep.subr.bf16.mxu0 0
    %203 = vmatpush1.bf16.msra.mxu0 %v190
    %204 = vmatprep.subr.bf16.mxu0 0
    %205 = vmatpush1.bf16.msra.mxu0 %v191
    %206 = vmatprep.subr.bf16.mxu0 0
    %207 = vmatpush1.bf16.msra.mxu0 %v192
    %208 = vmatprep.subr.bf16.mxu0 0
    %209 = vmatpush1.bf16.msra.mxu0 0
    %210 = vmatprep.subr.bf16.mxu0 0
    %211 = vmatpush1.bf16.msra.mxu0 0
    %212 = vmatprep.subr.bf16.mxu0 0
    %213 = vmatpush1.bf16.msra.mxu0 0
    %214 = vmatprep.subr.bf16.mxu0 0
    %215 = vmatpush1.bf16.msra.mxu0 0
    %216 = vmatprep.subr.bf16.mxu0 0
    %217 = vmatpush1.bf16.msra.mxu0 0
    %218 = vmatprep.subr.bf16.mxu0 0
    %219 = vmatpush1.bf16.msra.mxu0 0
    %220 = vmatprep.subr.bf16.mxu0 0
    %221 = vmatpush1.bf16.msra.mxu0 0
    %222 = vmatprep.subr.bf16.mxu0 0
    %223 = vmatpush1.bf16.msra.mxu0 0
    %224 = vmatprep.subr.bf16.mxu0 0
    %225 = vmatpush1.bf16.msra.mxu0 0
    %226 = vmatprep.subr.bf16.mxu0 0
    %227 = vmatpush1.bf16.msra.mxu0 0
    %228 = vmatprep.subr.bf16.mxu0 0
    %229 = vmatpush1.bf16.msra.mxu0 0
    %230 = vmatprep.subr.bf16.mxu0 0
    %231 = vmatpush1.bf16.msra.mxu0 0
    %232 = vmatprep.mubr.bf16.mxu0 0
    %233 = vmatmul.mubr.bf16.gmra.mrb[0].mxu0 %v198
    %v234 = vpop.f32.mrb[0].mxu0
    %v235 = vadd.f32 0.0, %v234
    %v236 = vpop.f32.mrb[0].mxu0
    %v237 = vpop.f32.mrb[0].mxu0
    %v238 = vadd.f32 0.0, %v237
    %v239 = vpop.f32.mrb[0].mxu0
    %240 = vdwg.mxu0
    %v241 = vadd.f32 %v163, %v235
    %v242 = vadd.f32 %v164, %v238
    %243 = vst.msk [vmem:[#allocation2] sm:$0xff] %vm93, %v241
    %244 = vst.msk [vmem:[#allocation2 + $0x8] sm:$0xff] %vm93, %v242
    // Predicated region
    $region30: #{tpu_custom_call.1} parent=1 // pred_check
      %p245 = pneg %p47
    $region31: #{tpu_custom_call.1} parent=1 // pred_check_branch
      %247 = sbr.rel (%p245) target = $region33
    $region32: #{tpu_custom_call.1} parent=1 // pred_region
      %v248 = vld [vmem:[%s1] sm:$0xff]
      %v249 = vld [vmem:[%s1 + $0x8] sm:$0xff]
      %v250 = vld [vmem:[#allocation2] sm:$0xff]
      %v251 = vld [vmem:[#allocation2 + $0x8] sm:$0xff]
      %253 = vset.pattern.permute.xlu0 0
      %254 = vperm.xlu0 %253, %v248
      %v255 = vpop.permute.xlu0 %254
      %258 = vset.pattern.permute.xlu0 0
      %259 = vperm.xlu0 %258, %v249
      %v260 = vpop.permute.xlu0 %259
      %v262 = vmul.f32 %v255, %v250
      %v263 = vmul.f32 %v260, %v251
      %264 = vst.msk [vmem:[#allocation8] sm:$0xff] %vm93, %v262
      %265 = vst.msk [vmem:[#allocation8 + $0x8] sm:$0xff] %vm93, %v263
    $region33: #{tpu_custom_call.1} parent=1 // pred_fallthru
      _
    // Predicated region
    $region34: #{tpu_custom_call.1} parent=1 // pred_check
      _
    $region35: #{tpu_custom_call.1} parent=1 // pred_check_branch
      %267 = sbr.rel (0) target = $region37
    $region36: #{tpu_custom_call.1} parent=1 // pred_region
      %s269 = ssub.s32 256, 256
      %270 = vsyncadd [#allocation5], %s269
      %s271 = sshll.u32 [#allocation8], 4
      %s272 = int_to_ptr.vmem [resolvable:$true] %s271
      %277 = dma.vmem_to_hbm [thread:$0]  %s272, 256, %s4, [#allocation5], 128, 128, 8
    $region37: #{tpu_custom_call.1} parent=1 // pred_fallthru
      _
    // Predicated region
    $region38: #{tpu_custom_call.1} parent=1 // pred_check
      _
    $region39: #{tpu_custom_call.1} parent=1 // pred_check_branch
      %279 = sbr.rel (0) target = $region41
    $region40: #{tpu_custom_call.1} parent=1 // pred_region
      %280 = dma.done [#allocation5], 256
    $region41: #{tpu_custom_call.1} parent=1 // pred_fallthru
      _
    %281 = vsyncpa [#allocation4], 1
    %282 = vsyncpa [#allocation7], 1
    %283 = vsyncpa [#allocation5], 1

</llo_original>
